<compile_context>
chip_gen: v6e
topology: v6e:2x2x1
jax: 0.10.0
libtpu: 0.0.40
codegen_flags: <defaults>
</compile_context>

<pallas_src>
import jax
import jax.numpy as jnp
from jax import lax
from jax.experimental import pallas as pl
from jax.experimental.pallas import tpu as pltpu


def _round_up(x, m):
    return (x + m - 1) // m * m


def _device_defaults():
    """Generation-aware tile / VMEM defaults."""
    kind = ""
    try:
        kind = jax.devices()[0].device_kind.lower()
    except Exception:
        pass
    if "v7" in kind or "7x" in kind or "ironwood" in kind:
        # v7x: 64 MiB physical VMEM per TensorCore -> stay well under it.
        return dict(tm=512, tf_cap=1024, vmem_limit=56 * 1024 * 1024)
    if "v6" in kind or "trillium" in kind or "v5" in kind:
        # v5e/v5p/v6e: 128 MiB VMEM -> big row tile to clear the HBM roofline.
        return dict(tm=1024, tf_cap=2048, vmem_limit=100 * 1024 * 1024)
    # Unknown / older parts: conservative.
    return dict(tm=512, tf_cap=1024, vmem_limit=48 * 1024 * 1024)


def _select_tiles(M, d_model, d_ff, defaults, *, x_bytes, w_bytes, out_bytes, acc_used):
    """Pick (tm, tf, padded_d_ff) under an explicit VMEM budget."""
    budget = int(defaults["vmem_limit"] * 0.85)
    tf_cap = defaults["tf_cap"]
    acc_row_bytes = d_model * 4 if acc_used else 0

    def vmem_use(tm, tf):
        return (2 * tm * d_model * x_bytes        # x     (double-buffered)
                + 2 * tf * d_model * w_bytes      # wi
                + 2 * d_model * tf * w_bytes      # wo
                + 2 * tm * d_model * out_bytes    # out
                + tm * acc_row_bytes)             # f32 scratch (if used)

    tm = max(8, min(_round_up(defaults["tm"], 8), _round_up(M, 8)))
    divisor_cands = (2048, 1536, 1280, 1024, 896, 768, 640, 512, 384, 256, 128)
    while True:
        # 1) Full-d_ff weights: block index constant over the whole grid ->
        #    wi/wo DMA'd exactly once.  Best when they fit.
        if vmem_use(tm, d_ff) <= budget:
            return tm, d_ff, d_ff
        # 2) Largest 128-aligned divisor of d_ff under the cap that fits.
        for c in divisor_cands:
            if c <= min(d_ff, tf_cap) and d_ff % c == 0 and vmem_use(tm, c) <= budget:
                return tm, c, d_ff
        # 3) No clean divisor: zero-pad d_ff to a multiple of the largest
        #    fitting 128-aligned tile (padded wi rows / wo cols are zero).
        for c in divisor_cands:
            if c <= tf_cap and c <= _round_up(d_ff, 128) and vmem_use(tm, c) <= budget:
                return tm, c, _round_up(d_ff, c)
        # 4) Still too big: halve the row tile and retry.
        if tm <= 8:
            c = min(_round_up(d_ff, 128), 128)
            return tm, c, _round_up(d_ff, c)
        tm = max(8, tm // 2)


def _ffn_kernel_acc_out(x_ref, wi_ref, wo_ref, o_ref):
    """f32 output resident over the d_ff axis: accumulate directly into it."""
    k = pl.program_id(1)

    @pl.when(k == 0)
    def _():
        o_ref[...] = jnp.zeros_like(o_ref)

    # h[m, f] = sum_d x[m, d] * wi[f, d]  (contract last dims; no transpose)
    h = lax.dot_general(
        x_ref[...], wi_ref[...],
        dimension_numbers=(((1,), (1,)), ((), ())),
        preferred_element_type=jnp.float32)
    h = jnp.maximum(h, 0.0)            # ReLU; dropout == identity (eval mode)

    # o[m, d] += sum_f h[m, f] * wo[d, f]
    o_ref[...] += lax.dot_general(
        h.astype(wo_ref.dtype), wo_ref[...],
        dimension_numbers=(((1,), (1,)), ((), ())),
        preferred_element_type=jnp.float32)


def _ffn_kernel_scratch(x_ref, wi_ref, wo_ref, o_ref, acc_ref):
    """f32 scratch accumulator; used when the output dtype is not f32."""
    k = pl.program_id(1)

    @pl.when(k == 0)
    def _():
        acc_ref[...] = jnp.zeros_like(acc_ref)

    h = lax.dot_general(
        x_ref[...], wi_ref[...],
        dimension_numbers=(((1,), (1,)), ((), ())),
        preferred_element_type=jnp.float32)
    h = jnp.maximum(h, 0.0)

    acc_ref[...] += lax.dot_general(
        h.astype(wo_ref.dtype), wo_ref[...],
        dimension_numbers=(((1,), (1,)), ((), ())),
        preferred_element_type=jnp.float32)

    @pl.when(k == pl.num_programs(1) - 1)
    def _():
        o_ref[...] = acc_ref[...].astype(o_ref.dtype)


def parallel_dense_relu_dense(hidden_states, wi_weight, wo_weight, *,
                              compute_dtype=jnp.bfloat16,
                              tm=None, tf=None, vmem_limit_bytes=None):
    """T5 FFN forward: wo(relu(wi(x))), dropout = identity (eval mode).

    hidden_states: (B, S, d_model)
    wi_weight:     (d_ff, d_model)   -- nn.Linear(d_model, d_ff).weight
    wo_weight:     (d_model, d_ff)   -- nn.Linear(d_ff, d_model).weight
    """
    B, S, d_model = hidden_states.shape
    d_ff = wi_weight.shape[0]
    assert wi_weight.shape == (d_ff, d_model)
    assert wo_weight.shape == (d_model, d_ff)
    M = B * S

    out_dtype = hidden_states.dtype
    acc_into_out = jnp.dtype(out_dtype) == jnp.dtype(jnp.float32)

    defaults = _device_defaults()
    if tm is not None:
        defaults["tm"] = tm
    if tf is not None:
        defaults["tf_cap"] = tf
    if vmem_limit_bytes is not None:
        defaults["vmem_limit"] = vmem_limit_bytes

    compute_dtype = compute_dtype or hidden_states.dtype
    x_bytes = jnp.dtype(compute_dtype).itemsize
    w_bytes = jnp.dtype(compute_dtype).itemsize
    out_bytes = jnp.dtype(out_dtype).itemsize

    tm_sel, tf_sel, d_ff_p = _select_tiles(
        M, d_model, d_ff, defaults,
        x_bytes=x_bytes, w_bytes=w_bytes, out_bytes=out_bytes,
        acc_used=not acc_into_out)

    # One-time wrapper-side casts (bf16 MXU path, half the HBM/VMEM bytes).
    x2d = hidden_states.reshape(M, d_model).astype(compute_dtype)
    wi_c = wi_weight.astype(compute_dtype)
    wo_c = wo_weight.astype(compute_dtype)
    if d_ff_p != d_ff:
        # Zero-padding the reduction (d_ff) axis is exact: padded wi rows are 0
        # -> relu(0) = 0 -> they contribute nothing to the second matmul.
        wi_c = jnp.pad(wi_c, ((0, d_ff_p - d_ff), (0, 0)))
        wo_c = jnp.pad(wo_c, ((0, 0), (0, d_ff_p - d_ff)))

    grid = (pl.cdiv(M, tm_sel), d_ff_p // tf_sel)

    # Weights are re-read once per row tile only if d_ff is tiled; if tf == d_ff
    # their block index is constant over the whole grid -> single DMA.
    weight_passes = grid[0] if grid[1] > 1 else 1
    cost = pl.CostEstimate(
        flops=4 * M * d_model * d_ff,
        transcendentals=0,
        bytes_accessed=(x2d.size * x2d.dtype.itemsize
                        + weight_passes * (wi_c.size + wo_c.size) * w_bytes
                        + M * d_model * out_bytes))

    in_specs = [
        pl.BlockSpec((tm_sel, d_model), lambda i, k: (i, 0)),
        pl.BlockSpec((tf_sel, d_model), lambda i, k: (k, 0)),
        pl.BlockSpec((d_model, tf_sel), lambda i, k: (0, k)),
    ]
    out_specs = pl.BlockSpec((tm_sel, d_model), lambda i, k: (i, 0))

    if acc_into_out:
        kernel = _ffn_kernel_acc_out
        scratch_shapes = []
    else:
        kernel = _ffn_kernel_scratch
        scratch_shapes = [pltpu.VMEM((tm_sel, d_model), jnp.float32)]

    out2d = pl.pallas_call(
        kernel,
        out_shape=jax.ShapeDtypeStruct((M, d_model), out_dtype),
        grid_spec=pltpu.PrefetchScalarGridSpec(
            num_scalar_prefetch=0,
            grid=grid,
            in_specs=in_specs,
            out_specs=out_specs,
            scratch_shapes=scratch_shapes),
        compiler_params=pltpu.CompilerParams(
            dimension_semantics=("parallel", "arbitrary"),
            vmem_limit_bytes=defaults["vmem_limit"]),
        cost_estimate=cost,
    )(x2d, wi_c, wo_c)

    return out2d.reshape(B, S, d_model)


def _reference(hidden_states, wi_weight, wo_weight):
    h = hidden_states @ wi_weight.T
    h = jnp.maximum(h, 0.0)
    return h @ wo_weight.T


if __name__ == "__main__":
    # Small config consistent with the module: d_model=32, d_ff=64.
    B, S, d_model, d_ff = 2, 8, 32, 64

    key = jax.random.PRNGKey(0)
    kx, kwi, kwo = jax.random.split(key, 3)

    hidden_states = jax.random.normal(kx, (B, S, d_model), dtype=jnp.float32)
    # nn.Linear convention: weight shape is (out_features, in_features).
    wi_weight = jax.random.normal(kwi, (d_ff, d_model), dtype=jnp.float32) * 0.05
    wo_weight = jax.random.normal(kwo, (d_model, d_ff), dtype=jnp.float32) * 0.05

    out = parallel_dense_relu_dense(hidden_states, wi_weight, wo_weight)
    out = jax.block_until_ready(out)

    ref = _reference(hidden_states, wi_weight, wo_weight)
    assert out.shape == (B, S, d_model)
    # bf16 MXU inputs with f32 accumulation -> loosen tolerance vs f32 reference.
    assert jnp.allclose(out, ref, atol=2e-2, rtol=2e-2), "mismatch vs reference"

    print("KERNEL_OK")
</pallas_src>

<mosaic_0001>
module attributes {stable_mosaic.version = 11 : i64} {
  func.func @_ffn_kernel_acc_out(%arg0: i32, %arg1: i32, %arg2: memref<16x32xbf16, #tpu.memory_space<vmem>>, %arg3: memref<64x32xbf16, #tpu.memory_space<vmem>>, %arg4: memref<32x64xbf16, #tpu.memory_space<vmem>>, %arg5: memref<16x32xf32, #tpu.memory_space<vmem>>) attributes {dimension_semantics = [#tpu.dimension_semantics<parallel>, #tpu.dimension_semantics<arbitrary>], iteration_bounds = array<i64: 1, 1>, scalar_prefetch = 0 : i64, scratch_operands = 0 : i64, tpu.core_type = #tpu.core_type<tc>, window_params = [{transform_indices = @transform_0, window_bounds = array<i64: 16, 32>}, {transform_indices = @transform_1, window_bounds = array<i64: 64, 32>}, {transform_indices = @transform_2, window_bounds = array<i64: 32, 64>}, {transform_indices = @transform_3, window_bounds = array<i64: 16, 32>}]} {
    %c0_i32 = arith.constant 0 : i32
    %0 = arith.cmpi eq, %arg1, %c0_i32 : i32
    %1 = arith.extui %0 : i1 to i32
    %c0_i32_0 = arith.constant 0 : i32
    %2 = arith.cmpi ne, %1, %c0_i32_0 : i32
    scf.if %2 {
      %cst_12 = arith.constant 0.000000e+00 : f32
      %14 = vector.broadcast %cst_12 : f32 to vector<16x32xf32>
      %c0_13 = arith.constant 0 : index
      %c0_14 = arith.constant 0 : index
      %15 = vector.load %arg5[%c0_13, %c0_14] : memref<16x32xf32, #tpu.memory_space<vmem>>, vector<16x32xf32>
      tpu.vector_store %arg5[%c0_13, %c0_14], %14 {strides = array<i32>} : memref<16x32xf32, #tpu.memory_space<vmem>>, vector<16x32xf32>,
    } else {
    }
    %c0 = arith.constant 0 : index
    %c0_1 = arith.constant 0 : index
    %3 = vector.load %arg2[%c0, %c0_1] : memref<16x32xbf16, #tpu.memory_space<vmem>>, vector<16x32xbf16>
    %c0_2 = arith.constant 0 : index
    %c0_3 = arith.constant 0 : index
    %4 = vector.load %arg3[%c0_2, %c0_3] : memref<64x32xbf16, #tpu.memory_space<vmem>>, vector<64x32xbf16>
    %cst = arith.constant dense<0.000000e+00> : vector<16x64xf32>
    %5 = tpu.matmul %3, %4, %cst {dimension_numbers = #tpu.dot_dimension_numbers<[1], [1], [0], [0], [0, 0, 1, 0], [], []>} : vector<16x32xbf16>, vector<64x32xbf16>, vector<16x64xf32> -> vector<16x64xf32>
    %cst_4 = arith.constant 0.000000e+00 : f32
    %6 = vector.broadcast %cst_4 : f32 to vector<16x64xf32>
    %7 = arith.maximumf %5, %6 : vector<16x64xf32>
    %c0_5 = arith.constant 0 : index
    %c0_6 = arith.constant 0 : index
    %8 = vector.load %arg5[%c0_5, %c0_6] : memref<16x32xf32, #tpu.memory_space<vmem>>, vector<16x32xf32>
    %9 = arith.truncf %7 : vector<16x64xf32> to vector<16x64xbf16>
    %c0_7 = arith.constant 0 : index
    %c0_8 = arith.constant 0 : index
    %10 = vector.load %arg4[%c0_7, %c0_8] : memref<32x64xbf16, #tpu.memory_space<vmem>>, vector<32x64xbf16>
    %cst_9 = arith.constant dense<0.000000e+00> : vector<16x32xf32>
    %11 = tpu.matmul %9, %10, %cst_9 {dimension_numbers = #tpu.dot_dimension_numbers<[1], [1], [0], [0], [0, 0, 1, 0], [], []>} : vector<16x64xbf16>, vector<32x64xbf16>, vector<16x32xf32> -> vector<16x32xf32>
    %12 = arith.addf %8, %11 : vector<16x32xf32>
    %c0_10 = arith.constant 0 : index
    %c0_11 = arith.constant 0 : index
    %13 = vector.load %arg5[%c0_10, %c0_11] : memref<16x32xf32, #tpu.memory_space<vmem>>, vector<16x32xf32>
    tpu.vector_store %arg5[%c0_10, %c0_11], %12 {strides = array<i32>} : memref<16x32xf32, #tpu.memory_space<vmem>>, vector<16x32xf32>,
    return
  }
  func.func @transform_0(%arg0: i32, %arg1: i32) -> (i32, i32) {
    %c0_i32 = arith.constant 0 : i32
    %c0_i32_0 = arith.constant 0 : i32
    return %arg0, %c0_i32 : i32, i32
  }
  func.func @transform_1(%arg0: i32, %arg1: i32) -> (i32, i32) {
    %c0_i32 = arith.constant 0 : i32
    %c0_i32_0 = arith.constant 0 : i32
    return %arg1, %c0_i32 : i32, i32
  }
  func.func @transform_2(%arg0: i32, %arg1: i32) -> (i32, i32) {
    %c0_i32 = arith.constant 0 : i32
    %c0_i32_0 = arith.constant 0 : i32
    return %c0_i32, %arg1 : i32, i32
  }
  func.func @transform_3(%arg0: i32, %arg1: i32) -> (i32, i32) {
    %c0_i32 = arith.constant 0 : i32
    %c0_i32_0 = arith.constant 0 : i32
    return %arg0, %c0_i32 : i32, i32
  }
}

</mosaic_0001>

<llo_original>
// kernel: tpu_custom_call.1
$region0: #{tpu_custom_call.1}
  #allocation0 [shape = 'u32[]', space=smem, size = 0x4, offset = 0x4, fixed_abs, tag = 'smem constant byte address 0x4 - core index']
  #allocation1 [shape = 'u32[144,128]{1,0:T(1,128)}', space=vmem, size = 0x12000, scoped, tag = 'internal scratch']
  %s0 = inlined_call_operand.vmem [shape: bf16[16,32], index: 0, kind: input, shape index: {}]
  %s1 = inlined_call_operand.vmem [shape: bf16[64,32], index: 1, kind: input, shape index: {}]
  %s2 = inlined_call_operand.vmem [shape: bf16[32,64], index: 2, kind: input, shape index: {}]
  %s3 = inlined_call_operand.hbm [shape: f32[16,32], index: 3, kind: output, shape index: {}]
  %s4 = sld [smem:[#allocation0]]
  $region26: #{tpu_custom_call.1} parent=0
    _
  %s6 = ssub.s32 1, %s4
  %s7 = scalar_select 0, %s6, %s4
  $region1: #{tpu_custom_call.1} parent=0
    #allocation2 [shape = 'u8[8192]{0}', space=vmem, size = 0x2000, scoped, tag = 'output window, operand 0, single buffered']
    #allocation3 [shape = 's32[1]{0}', space=sflag, size = 0x4, scoped, tag = 'scoped memory for tpu_custom_call.1']
    %8 = vsyncpa [#allocation3], 0
    // Predicated region
    $region2: #{tpu_custom_call.1} parent=1 // pred_check
      _
    $region3: #{tpu_custom_call.1} parent=1 // pred_check_branch
      %10 = sbr.rel (0) target = $region5
    $region4: #{tpu_custom_call.1} parent=1 // pred_region
      _
    $region5: #{tpu_custom_call.1} parent=1 // pred_fallthru
      _
    // Predicated region
    $region6: #{tpu_custom_call.1} parent=1 // pred_check
      _
    $region7: #{tpu_custom_call.1} parent=1 // pred_check_branch
      %12 = sbr.rel (0) target = $region9
    $region8: #{tpu_custom_call.1} parent=1 // pred_region
      _
    $region9: #{tpu_custom_call.1} parent=1 // pred_fallthru
      _
    // Predicated region
    $region10: #{tpu_custom_call.1} parent=1 // pred_check
      _
    $region11: #{tpu_custom_call.1} parent=1 // pred_check_branch
      %14 = sbr.rel (0) target = $region13
    $region12: #{tpu_custom_call.1} parent=1 // pred_region
      _
    $region13: #{tpu_custom_call.1} parent=1 // pred_fallthru
      _
    %p16 = scmp.eq.s32.totalorder 0, 0
    // Predicated region
    $region14: #{tpu_custom_call.1} parent=1 // pred_check
      %p17 = pneg %p16
    $region15: #{tpu_custom_call.1} parent=1 // pred_check_branch
      %19 = sbr.rel (%p17) target = $region17
    $region16: #{tpu_custom_call.1} parent=1 // pred_region
      %vm20 = vcmask 261120
      %21 = vst.msk [vmem:[#allocation2] sm:$0xff] %vm20, 0.0
      %22 = vst.msk [vmem:[#allocation2 + $0x8] sm:$0xff] %vm20, 0.0
    $region17: #{tpu_custom_call.1} parent=1 // pred_fallthru
      _
    %v23 = vld [vmem:[%s0] sm:$0xf]
    %v24 = vld [vmem:[%s0 + $0x4] sm:$0xf]
    %v25 = vld [vmem:[%s1] sm:$0xf]
    %v26 = vld [vmem:[%s1 + $0x4] sm:$0xf]
    %v27 = vld [vmem:[%s1 + $0x8] sm:$0xf]
    %v28 = vld [vmem:[%s1 + $0xc] sm:$0xf]
    %v29 = vld [vmem:[%s1 + $0x10] sm:$0xf]
    %v30 = vld [vmem:[%s1 + $0x14] sm:$0xf]
    %v31 = vld [vmem:[%s1 + $0x18] sm:$0xf]
    %v32 = vld [vmem:[%s1 + $0x1c] sm:$0xf]
    %v35 = vunpack.c.l.b16 %v23
    %v36 = vunpack.c.l.b16 %v24
    %v37 = vpack.c.b16 %v36, %v35
    %v46 = vunpack.c.l.b16 %v25
    %v47 = vunpack.c.l.b16 %v26
    %v48 = vunpack.c.l.b16 %v27
    %v49 = vunpack.c.l.b16 %v28
    %v50 = vunpack.c.l.b16 %v29
    %v51 = vunpack.c.l.b16 %v30
    %v52 = vunpack.c.l.b16 %v31
    %v53 = vunpack.c.l.b16 %v32
    %v54 = vpack.c.b16 %v47, %v46
    %v55 = vpack.c.b16 %v49, %v48
    %v56 = vpack.c.b16 %v51, %v50
    %v57 = vpack.c.b16 %v53, %v52
    %vm58 = vcmask 261120
    %v60 = vsel %vm58, %v37, 0
    %v63 = vsel %vm58, %v54, 0
    %v66 = vsel %vm58, %v55, 0
    %v69 = vsel %vm58, %v56, 0
    %v72 = vsel %vm58, %v57, 0
    %74 = vmatprep.subr.bf16.mxu0 0
    %75 = vmatpush1.bf16.xpose.msra.mxu0 0
    %76 = vmatprep.subr.bf16.mxu0 0
    %77 = vmatpush1.bf16.xpose.msra.mxu0 0
    %78 = vmatprep.subr.bf16.mxu0 0
    %79 = vmatpush1.bf16.xpose.msra.mxu0 0
    %80 = vmatprep.subr.bf16.mxu0 0
    %81 = vmatpush1.bf16.xpose.msra.mxu0 0
    %82 = vmatprep.subr.bf16.mxu0 0
    %83 = vmatpush1.bf16.xpose.msra.mxu0 %v72
    %84 = vmatprep.subr.bf16.mxu0 0
    %85 = vmatpush1.bf16.xpose.msra.mxu0 %v69
    %86 = vmatprep.subr.bf16.mxu0 0
    %87 = vmatpush1.bf16.xpose.msra.mxu0 %v66
    %88 = vmatprep.subr.bf16.mxu0 0
    %89 = vmatpush1.bf16.xpose.msra.mxu0 %v63
    %90 = vmatprep.subr.bf16.mxu0 0
    %91 = vmatpush2.bf16.xpose.msra.mxu0 0
    %92 = vmatprep.subr.bf16.mxu0 0
    %93 = vmatpush2.bf16.xpose.msra.mxu0 0
    %94 = vmatprep.subr.bf16.mxu0 0
    %95 = vmatpush2.bf16.xpose.msra.mxu0 0
    %96 = vmatprep.subr.bf16.mxu0 0
    %97 = vmatpush2.bf16.xpose.msra.mxu0 0
    %98 = vmatprep.subr.bf16.mxu0 0
    %99 = vmatpush2.bf16.xpose.msra.mxu0 0
    %100 = vmatprep.subr.bf16.mxu0 0
    %101 = vmatpush2.bf16.xpose.msra.mxu0 0
    %102 = vmatprep.subr.bf16.mxu0 0
    %103 = vmatpush2.bf16.xpose.msra.mxu0 0
    %104 = vmatprep.subr.bf16.mxu0 0
    %105 = vmatpush2.bf16.xpose.msra.mxu0 0
    %106 = vmatprep.mubr.bf16.mxu0 0
    %107 = vmatmul.mubr.bf16.gmra.mxu0 %v60
    %v108 = vpop.f32.mrf.mxu0
    %v109 = vadd.f32 0.0, %v108
    %v110 = vpop.f32.mrf.mxu0
    %v111 = vpop.f32.mrf.mxu0
    %v112 = vadd.f32 0.0, %v111
    %v113 = vpop.f32.mrf.mxu0
    %114 = vdwg.mxu0
    %v115 = vmax.f32 %v109, 0.0
    %v116 = vmax.f32 %v112, 0.0
    %v117 = vld [vmem:[#allocation2] sm:$0xff]
    %v118 = vld [vmem:[#allocation2 + $0x8] sm:$0xff]
    %v119 = vpack.c.bf16 %v116, %v115
    %v120 = vld [vmem:[%s2] sm:$0xf]
    %v121 = vld [vmem:[%s2 + $0x4] sm:$0xf]
    %v122 = vld [vmem:[%s2 + $0x8] sm:$0xf]
    %v123 = vld [vmem:[%s2 + $0xc] sm:$0xf]
    %v128 = vunpack.c.l.b16 %v120
    %v129 = vunpack.c.l.b16 %v121
    %v130 = vunpack.c.l.b16 %v122
    %v131 = vunpack.c.l.b16 %v123
    %v132 = vpack.c.b16 %v129, %v128
    %v133 = vpack.c.b16 %v131, %v130
    %vm134 = vcmask 523264
    %v136 = vsel %vm134, %v119, 0
    %v139 = vsel %vm134, %v132, 0
    %v142 = vsel %vm134, %v133, 0
    %144 = vmatprep.subr.bf16.mxu0 0
    %145 = vmatpush1.bf16.xpose.msra.mxu0 0
    %146 = vmatprep.subr.bf16.mxu0 0
    %147 = vmatpush1.bf16.xpose.msra.mxu0 0
    %148 = vmatprep.subr.bf16.mxu0 0
    %149 = vmatpush1.bf16.xpose.msra.mxu0 0
    %150 = vmatprep.subr.bf16.mxu0 0
    %151 = vmatpush1.bf16.xpose.msra.mxu0 0
    %152 = vmatprep.subr.bf16.mxu0 0
    %153 = vmatpush1.bf16.xpose.msra.mxu0 0
    %154 = vmatprep.subr.bf16.mxu0 0
    %155 = vmatpush1.bf16.xpose.msra.mxu0 0
    %156 = vmatprep.subr.bf16.mxu0 0
    %157 = vmatpush1.bf16.xpose.msra.mxu0 %v142
    %158 = vmatprep.subr.bf16.mxu0 0
    %159 = vmatpush1.bf16.xpose.msra.mxu0 %v139
    %160 = vmatprep.subr.bf16.mxu0 0
    %161 = vmatpush2.bf16.xpose.msra.mxu0 0
    %162 = vmatprep.subr.bf16.mxu0 0
    %163 = vmatpush2.bf16.xpose.msra.mxu0 0
    %164 = vmatprep.subr.bf16.mxu0 0
    %165 = vmatpush2.bf16.xpose.msra.mxu0 0
    %166 = vmatprep.subr.bf16.mxu0 0
    %167 = vmatpush2.bf16.xpose.msra.mxu0 0
    %168 = vmatprep.subr.bf16.mxu0 0
    %169 = vmatpush2.bf16.xpose.msra.mxu0 0
    %170 = vmatprep.subr.bf16.mxu0 0
    %171 = vmatpush2.bf16.xpose.msra.mxu0 0
    %172 = vmatprep.subr.bf16.mxu0 0
    %173 = vmatpush2.bf16.xpose.msra.mxu0 0
    %174 = vmatprep.subr.bf16.mxu0 0
    %175 = vmatpush2.bf16.xpose.msra.mxu0 0
    %176 = vmatprep.mubr.bf16.mxu0 0
    %177 = vmatmul.mubr.bf16.gmra.mxu0 %v136
    %v178 = vpop.f32.mrf.mxu0
    %v179 = vadd.f32 0.0, %v178
    %v180 = vpop.f32.mrf.mxu0
    %v181 = vpop.f32.mrf.mxu0
    %v182 = vadd.f32 0.0, %v181
    %v183 = vpop.f32.mrf.mxu0
    %184 = vdwg.mxu0
    %v185 = vadd.f32 %v117, %v179
    %v186 = vadd.f32 %v118, %v182
    %187 = vst.msk [vmem:[#allocation2] sm:$0xff] %vm58, %v185
    %188 = vst.msk [vmem:[#allocation2 + $0x8] sm:$0xff] %vm58, %v186
    // Predicated region
    $region18: #{tpu_custom_call.1} parent=1 // pred_check
      _
    $region19: #{tpu_custom_call.1} parent=1 // pred_check_branch
      %190 = sbr.rel (0) target = $region21
    $region20: #{tpu_custom_call.1} parent=1 // pred_region
      %s192 = ssub.s32 256, 256
      %193 = vsyncadd [#allocation3], %s192
      %s194 = sshll.u32 [#allocation2], 4
      %s195 = int_to_ptr.vmem [resolvable:$true] %s194
      %200 = dma.vmem_to_hbm [thread:$0]  %s195, 256, %s3, [#allocation3], 128, 128, 8
    $region21: #{tpu_custom_call.1} parent=1 // pred_fallthru
      _
    // Predicated region
    $region22: #{tpu_custom_call.1} parent=1 // pred_check
      _
    $region23: #{tpu_custom_call.1} parent=1 // pred_check_branch
      %202 = sbr.rel (0) target = $region25
    $region24: #{tpu_custom_call.1} parent=1 // pred_region
      %203 = dma.done [#allocation3], 256
    $region25: #{tpu_custom_call.1} parent=1 // pred_fallthru
      _
    %204 = vsyncpa [#allocation3], 1

</llo_original>
